<compile_context>
chip_gen: v7x
topology: tpu7x:2x2x1
jax: 0.10.0
libtpu: 0.0.40
codegen_flags: <defaults>
</compile_context>

<pallas_src>
import functools

import jax
import jax.numpy as jnp
from jax.experimental import pallas as pl
from jax.experimental.pallas import tpu as pltpu


def _round_up(n, m):
    return ((n + m - 1) // m) * m


def encoder2d_kernel(x_ref,
                     w_in_ref, b_in_ref,
                     w1_ref, b1_ref, w2_ref, b2_ref,
                     w3_ref, b3_ref, w4_ref, b4_ref,
                     w_head_ref, b_head_ref,
                     out_ref):
    x = x_ref[...]                                            # (TB, 2J) f32

    def lin_relu(h, w_ref, b_ref):
        # Linear (BN already folded in) + ReLU.  bf16 operands -> MXU-native,
        # f32 accumulation; bias (carries BN shift) + ReLU stay on the f32 VPU.
        y = jnp.dot(h.astype(jnp.bfloat16), w_ref[...],
                    preferred_element_type=jnp.float32) + b_ref[...]
        return jnp.maximum(y, 0.0)

    # enc_inp_block: Linear(2J, N) [+BN folded] + ReLU + Dropout(identity)
    h = lin_relu(x, w_in_ref, b_in_ref)

    # ResBlock(LBAD x4): LBAD = Linear(N, N, bias=False) [+BN folded] + ReLU + Dropout(id)
    res = h
    h = lin_relu(h, w1_ref, b1_ref)
    h = lin_relu(h, w2_ref, b2_ref) + res
    res = h
    h = lin_relu(h, w3_ref, b3_ref)
    h = lin_relu(h, w4_ref, b4_ref) + res

    # Fused heads: [fc_mean | fc_logvar] in one matmul; only the real 2L
    # columns are stored (no padded output stream).
    out_ref[...] = (jnp.dot(h.astype(jnp.bfloat16), w_head_ref[...],
                            preferred_element_type=jnp.float32)
                    + b_head_ref[...])


def prepare_kernel_params(params, *, n_joints):
    """Fold eval-mode BN into the Linears, fuse the two heads, pad only the
    hidden dim to a multiple of 128 and cast matmul weights to bf16.
    Done once on the host; padding is numerically exact (zeros)."""
    din = 2 * n_joints
    N = params["w_in"].shape[1]
    L = params["w_mean"].shape[1]
    NP = _round_up(N, 128)
    # NOTE: if neurons > 128 on v6e/v7x, rounding NP up to a multiple of 256
    # fills the 2x256 MXU better; 128 is native on v5e and exact here.

    s = params["bn_scale"]                                    # (5, N)
    t = params["bn_shift"]                                    # (5, N)

    def padw(a, rows, cols):                                  # weight -> bf16
        a = jnp.pad(a, ((0, rows - a.shape[0]), (0, cols - a.shape[1])))
        return a.astype(jnp.bfloat16)

    def padb(a, cols):                                        # bias stays f32
        return jnp.pad(a, ((0, 0), (0, cols - a.shape[1])))

    kp = dict(
        # input block: y = ReLU((xW + b)*s + t) = ReLU(x(W*s) + (b*s + t))
        w_in=padw(params["w_in"] * s[0][None, :], din, NP),
        b_in=padb(params["b_in"] * s[0][None, :] + t[0][None, :], NP),
        # fused mean/logvar head (rows padded to NP, columns left at 2L)
        w_head=padw(jnp.concatenate([params["w_mean"], params["w_logvar"]], axis=1),
                    NP, 2 * L),
        b_head=jnp.concatenate([params["b_mean"], params["b_logvar"]], axis=1),
    )
    # LBAD layers (bias-free Linear): y = ReLU(x(W*s) + t)
    for i, name in enumerate(("w1", "w2", "w3", "w4"), start=1):
        kp[name] = padw(params[name] * s[i][None, :], NP, NP)
        kp["b%d" % i] = padb(t[i][None, :], NP)
    return kp


def encoder2d_forward(x, kparams, *, n_joints, latent_dim, tile_b=2048):
    """x: any shape that flattens to (-1, 2*n_joints), e.g. (B, n_joints, 2).
    kparams: output of prepare_kernel_params (BN-folded, bf16, hidden-padded)."""
    din = 2 * n_joints
    x2d = x.reshape(-1, din).astype(jnp.float32)              # mirrors x.view(-1, 2*J)
    B = x2d.shape[0]

    NP = kparams["w_in"].shape[1]
    out_dim = kparams["w_head"].shape[1]                      # 2*latent_dim, unpadded

    # Batch tiling: minimal padding waste; >= 2 tiles so v7x's 2 TCs both work.
    B8 = _round_up(max(B, 8), 8)
    n_tiles = -(-B8 // int(tile_b))
    if n_tiles == 1 and B8 >= 16:
        n_tiles = 2
    tb = _round_up(-(-B8 // n_tiles), 8)
    B_pad = tb * n_tiles

    x_p = jnp.pad(x2d, ((0, B_pad - B), (0, 0))) if B_pad != B else x2d

    args = (x_p,
            kparams["w_in"], kparams["b_in"],
            kparams["w1"], kparams["b1"],
            kparams["w2"], kparams["b2"],
            kparams["w3"], kparams["b3"],
            kparams["w4"], kparams["b4"],
            kparams["w_head"], kparams["b_head"])

    # Weights/biases: grid-invariant full-array blocks (DMA'd once, constant
    # index_map so the pipeline does not refetch them per step).
    full = lambda a: pl.BlockSpec(a.shape, lambda i: (0, 0))
    in_specs = [pl.BlockSpec((tb, din), lambda i: (i, 0))] + [full(a) for a in args[1:]]
    out_spec = pl.BlockSpec((tb, out_dim), lambda i: (i, 0))

    # Explicit VMEM budget: double-buffered x/out tiles + weights (x2 buffers)
    # + ~4 live (tb, NP) f32 activation temporaries; cap at v7x's 64 MiB.
    weight_bytes = sum(int(a.size) * a.dtype.itemsize for a in args[1:])
    est = (2 * weight_bytes
           + 2 * (tb * din + tb * out_dim) * 4
           + 4 * tb * NP * 4)
    vmem_limit = int(min(64 << 20, max(32 << 20, 2 * est)))

    out = pl.pallas_call(
        encoder2d_kernel,
        out_shape=jax.ShapeDtypeStruct((B_pad, out_dim), jnp.float32),
        grid_spec=pltpu.PrefetchScalarGridSpec(
            num_scalar_prefetch=0,
            grid=(n_tiles,),
            in_specs=in_specs,
            out_specs=out_spec,
        ),
        compiler_params=pltpu.CompilerParams(
            dimension_semantics=("parallel",),     # batch tiles shard across TCs
            vmem_limit_bytes=vmem_limit),
    )(*args)

    out = out[:B]
    return out[:, :latent_dim], out[:, latent_dim:2 * latent_dim]


def init_params(key, *, n_joints, neurons, latent_dim):
    """Deterministic synthetic parameters matching the PyTorch module's shapes.

    All Linear weights are stored transposed: (in_features, out_features).
    The 5 BatchNorm1d layers (enc_inp + 4 LBAD) are represented (eval mode) as
    bn_scale/bn_shift of shape (5, neurons)."""
    din = 2 * n_joints
    ks = jax.random.split(key, 16)
    std = lambda fan_in: 1.0 / jnp.sqrt(fan_in)

    def lin(k, fi, fo):
        return jax.random.uniform(k, (fi, fo), jnp.float32, -std(fi), std(fi))

    eps = 1e-5
    gamma = 1.0 + 0.1 * jax.random.normal(ks[10], (5, neurons), jnp.float32)
    beta = 0.1 * jax.random.normal(ks[11], (5, neurons), jnp.float32)
    run_mean = 0.1 * jax.random.normal(ks[12], (5, neurons), jnp.float32)
    run_var = jnp.abs(1.0 + 0.1 * jax.random.normal(ks[13], (5, neurons), jnp.float32))
    bn_scale = gamma / jnp.sqrt(run_var + eps)
    bn_shift = beta - run_mean * bn_scale

    return dict(
        w_in=lin(ks[0], din, neurons),
        b_in=jax.random.uniform(ks[1], (1, neurons), jnp.float32, -std(din), std(din)),
        w1=lin(ks[2], neurons, neurons),
        w2=lin(ks[3], neurons, neurons),
        w3=lin(ks[4], neurons, neurons),
        w4=lin(ks[5], neurons, neurons),
        bn_scale=bn_scale,
        bn_shift=bn_shift,
        w_mean=lin(ks[6], neurons, latent_dim),
        b_mean=jax.random.uniform(ks[7], (1, latent_dim), jnp.float32,
                                  -std(neurons), std(neurons)),
        w_logvar=lin(ks[8], neurons, latent_dim),
        b_logvar=jax.random.uniform(ks[9], (1, latent_dim), jnp.float32,
                                    -std(neurons), std(neurons)),
    )


def encoder2d_reference(x, params, *, n_joints):
    """Pure-JAX f32 reference (unfolded, unpadded): PyTorch eval-mode semantics."""
    h = x.reshape(-1, 2 * n_joints).astype(jnp.float32)
    relu = lambda a: jnp.maximum(a, 0.0)
    bn = lambda a, i: a * params["bn_scale"][i] + params["bn_shift"][i]

    h = relu(bn(h @ params["w_in"] + params["b_in"], 0))
    res = h
    h = relu(bn(h @ params["w1"], 1))
    h = relu(bn(h @ params["w2"], 2)) + res
    res = h
    h = relu(bn(h @ params["w3"], 3))
    h = relu(bn(h @ params["w4"], 4)) + res
    return h @ params["w_mean"] + params["b_mean"], h @ params["w_logvar"] + params["b_logvar"]


def encoder2d_matched_reference(x, kparams, *, n_joints, latent_dim):
    """Pure-JAX reference using the same folded bf16 weights / f32 accumulation
    as the kernel (tight-tolerance structural check)."""
    h = x.reshape(-1, 2 * n_joints).astype(jnp.float32)

    def lin_relu(h, w, b):
        y = jnp.dot(h.astype(jnp.bfloat16), w, preferred_element_type=jnp.float32) + b
        return jnp.maximum(y, 0.0)

    h = lin_relu(h, kparams["w_in"], kparams["b_in"])
    res = h
    h = lin_relu(h, kparams["w1"], kparams["b1"])
    h = lin_relu(h, kparams["w2"], kparams["b2"]) + res
    res = h
    h = lin_relu(h, kparams["w3"], kparams["b3"])
    h = lin_relu(h, kparams["w4"], kparams["b4"]) + res
    out = (jnp.dot(h.astype(jnp.bfloat16), kparams["w_head"],
                   preferred_element_type=jnp.float32) + kparams["b_head"])
    return out[:, :latent_dim], out[:, latent_dim:2 * latent_dim]


if __name__ == "__main__":
    n_joints, neurons, latent_dim = 8, 32, 8
    batch = 60          # not a multiple of 8: exercises batch padding + 2-tile grid

    key = jax.random.PRNGKey(0)
    kx, kp = jax.random.split(key)
    # Input like a batch of 2D poses: (B, n_joints, 2) -> view(-1, 2*n_joints)
    x = jax.random.normal(kx, (batch, n_joints, 2), jnp.float32)
    params = init_params(kp, n_joints=n_joints, neurons=neurons, latent_dim=latent_dim)
    kparams = prepare_kernel_params(params, n_joints=n_joints)   # fold/fuse/pad/bf16 once

    fwd = jax.jit(functools.partial(encoder2d_forward, n_joints=n_joints,
                                    latent_dim=latent_dim))
    mean, logvar = fwd(x, kparams)
    jax.block_until_ready((mean, logvar))

    assert mean.shape == (batch, latent_dim) and logvar.shape == (batch, latent_dim)

    # Tight check against an identically-folded bf16 reference (kernel structure).
    m_ref, lv_ref = encoder2d_matched_reference(x, kparams, n_joints=n_joints,
                                                latent_dim=latent_dim)
    assert jnp.allclose(mean, m_ref, atol=1e-3, rtol=1e-3)
    assert jnp.allclose(logvar, lv_ref, atol=1e-3, rtol=1e-3)

    # Loose check against the pure-f32 PyTorch-eval reference (bf16 operands).
    m32, lv32 = encoder2d_reference(x, params, n_joints=n_joints)
    assert jnp.allclose(mean, m32, atol=5e-2, rtol=5e-2)
    assert jnp.allclose(logvar, lv32, atol=5e-2, rtol=5e-2)

    print("KERNEL_OK")
</pallas_src>

<mosaic_0001>
module attributes {stable_mosaic.version = 11 : i64} {
  func.func @encoder2d_kernel(%arg0: i32, %arg1: memref<32x16xf32, #tpu.memory_space<vmem>>, %arg2: memref<16x128xbf16, #tpu.memory_space<vmem>>, %arg3: memref<1x128xf32, #tpu.memory_space<vmem>>, %arg4: memref<128x128xbf16, #tpu.memory_space<vmem>>, %arg5: memref<1x128xf32, #tpu.memory_space<vmem>>, %arg6: memref<128x128xbf16, #tpu.memory_space<vmem>>, %arg7: memref<1x128xf32, #tpu.memory_space<vmem>>, %arg8: memref<128x128xbf16, #tpu.memory_space<vmem>>, %arg9: memref<1x128xf32, #tpu.memory_space<vmem>>, %arg10: memref<128x128xbf16, #tpu.memory_space<vmem>>, %arg11: memref<1x128xf32, #tpu.memory_space<vmem>>, %arg12: memref<128x16xbf16, #tpu.memory_space<vmem>>, %arg13: memref<1x16xf32, #tpu.memory_space<vmem>>, %arg14: memref<32x16xf32, #tpu.memory_space<vmem>>) attributes {dimension_semantics = [#tpu.dimension_semantics<parallel>], iteration_bounds = array<i64: 2>, scalar_prefetch = 0 : i64, scratch_operands = 0 : i64, tpu.core_type = #tpu.core_type<tc>, window_params = [{transform_indices = @transform_0, window_bounds = array<i64: 32, 16>}, {pipeline_mode = #tpu.pipeline_mode<synchronous>, transform_indices = @transform_1, window_bounds = array<i64: 16, 128>}, {pipeline_mode = #tpu.pipeline_mode<synchronous>, transform_indices = @transform_2, window_bounds = array<i64: 1, 128>}, {pipeline_mode = #tpu.pipeline_mode<synchronous>, transform_indices = @transform_3, window_bounds = array<i64: 128, 128>}, {pipeline_mode = #tpu.pipeline_mode<synchronous>, transform_indices = @transform_4, window_bounds = array<i64: 1, 128>}, {pipeline_mode = #tpu.pipeline_mode<synchronous>, transform_indices = @transform_5, window_bounds = array<i64: 128, 128>}, {pipeline_mode = #tpu.pipeline_mode<synchronous>, transform_indices = @transform_6, window_bounds = array<i64: 1, 128>}, {pipeline_mode = #tpu.pipeline_mode<synchronous>, transform_indices = @transform_7, window_bounds = array<i64: 128, 128>}, {pipeline_mode = #tpu.pipeline_mode<synchronous>, transform_indices = @transform_8, window_bounds = array<i64: 1, 128>}, {pipeline_mode = #tpu.pipeline_mode<synchronous>, transform_indices = @transform_9, window_bounds = array<i64: 128, 128>}, {pipeline_mode = #tpu.pipeline_mode<synchronous>, transform_indices = @transform_10, window_bounds = array<i64: 1, 128>}, {pipeline_mode = #tpu.pipeline_mode<synchronous>, transform_indices = @transform_11, window_bounds = array<i64: 128, 16>}, {pipeline_mode = #tpu.pipeline_mode<synchronous>, transform_indices = @transform_12, window_bounds = array<i64: 1, 16>}, {transform_indices = @transform_13, window_bounds = array<i64: 32, 16>}]} {
    %c0 = arith.constant 0 : index
    %c0_0 = arith.constant 0 : index
    %0 = vector.load %arg1[%c0, %c0_0] : memref<32x16xf32, #tpu.memory_space<vmem>>, vector<32x16xf32>
    %1 = arith.truncf %0 : vector<32x16xf32> to vector<32x16xbf16>
    %c0_1 = arith.constant 0 : index
    %c0_2 = arith.constant 0 : index
    %2 = vector.load %arg2[%c0_1, %c0_2] : memref<16x128xbf16, #tpu.memory_space<vmem>>, vector<16x128xbf16>
    %cst = arith.constant dense<0.000000e+00> : vector<32x128xf32>
    %3 = tpu.matmul %1, %2, %cst {dimension_numbers = #tpu.dot_dimension_numbers<[1], [0], [0], [1], [0, 0, 1, 1], [], []>} : vector<32x16xbf16>, vector<16x128xbf16>, vector<32x128xf32> -> vector<32x128xf32>
    %c0_3 = arith.constant 0 : index
    %c0_4 = arith.constant 0 : index
    %4 = vector.load %arg3[%c0_3, %c0_4] : memref<1x128xf32, #tpu.memory_space<vmem>>, vector<1x128xf32>
    %5 = vector.broadcast %4 : vector<1x128xf32> to vector<32x128xf32>
    %6 = arith.addf %3, %5 : vector<32x128xf32>
    %cst_5 = arith.constant 0.000000e+00 : f32
    %7 = vector.broadcast %cst_5 : f32 to vector<32x128xf32>
    %8 = arith.maximumf %6, %7 : vector<32x128xf32>
    %9 = arith.truncf %8 : vector<32x128xf32> to vector<32x128xbf16>
    %c0_6 = arith.constant 0 : index
    %c0_7 = arith.constant 0 : index
    %10 = vector.load %arg4[%c0_6, %c0_7] : memref<128x128xbf16, #tpu.memory_space<vmem>>, vector<128x128xbf16>
    %cst_8 = arith.constant dense<0.000000e+00> : vector<32x128xf32>
    %11 = tpu.matmul %9, %10, %cst_8 {dimension_numbers = #tpu.dot_dimension_numbers<[1], [0], [0], [1], [0, 0, 1, 1], [], []>} : vector<32x128xbf16>, vector<128x128xbf16>, vector<32x128xf32> -> vector<32x128xf32>
    %c0_9 = arith.constant 0 : index
    %c0_10 = arith.constant 0 : index
    %12 = vector.load %arg5[%c0_9, %c0_10] : memref<1x128xf32, #tpu.memory_space<vmem>>, vector<1x128xf32>
    %13 = vector.broadcast %12 : vector<1x128xf32> to vector<32x128xf32>
    %14 = arith.addf %11, %13 : vector<32x128xf32>
    %cst_11 = arith.constant 0.000000e+00 : f32
    %15 = vector.broadcast %cst_11 : f32 to vector<32x128xf32>
    %16 = arith.maximumf %14, %15 : vector<32x128xf32>
    %17 = arith.truncf %16 : vector<32x128xf32> to vector<32x128xbf16>
    %c0_12 = arith.constant 0 : index
    %c0_13 = arith.constant 0 : index
    %18 = vector.load %arg6[%c0_12, %c0_13] : memref<128x128xbf16, #tpu.memory_space<vmem>>, vector<128x128xbf16>
    %cst_14 = arith.constant dense<0.000000e+00> : vector<32x128xf32>
    %19 = tpu.matmul %17, %18, %cst_14 {dimension_numbers = #tpu.dot_dimension_numbers<[1], [0], [0], [1], [0, 0, 1, 1], [], []>} : vector<32x128xbf16>, vector<128x128xbf16>, vector<32x128xf32> -> vector<32x128xf32>
    %c0_15 = arith.constant 0 : index
    %c0_16 = arith.constant 0 : index
    %20 = vector.load %arg7[%c0_15, %c0_16] : memref<1x128xf32, #tpu.memory_space<vmem>>, vector<1x128xf32>
    %21 = vector.broadcast %20 : vector<1x128xf32> to vector<32x128xf32>
    %22 = arith.addf %19, %21 : vector<32x128xf32>
    %cst_17 = arith.constant 0.000000e+00 : f32
    %23 = vector.broadcast %cst_17 : f32 to vector<32x128xf32>
    %24 = arith.maximumf %22, %23 : vector<32x128xf32>
    %25 = arith.addf %24, %8 : vector<32x128xf32>
    %26 = arith.truncf %25 : vector<32x128xf32> to vector<32x128xbf16>
    %c0_18 = arith.constant 0 : index
    %c0_19 = arith.constant 0 : index
    %27 = vector.load %arg8[%c0_18, %c0_19] : memref<128x128xbf16, #tpu.memory_space<vmem>>, vector<128x128xbf16>
    %cst_20 = arith.constant dense<0.000000e+00> : vector<32x128xf32>
    %28 = tpu.matmul %26, %27, %cst_20 {dimension_numbers = #tpu.dot_dimension_numbers<[1], [0], [0], [1], [0, 0, 1, 1], [], []>} : vector<32x128xbf16>, vector<128x128xbf16>, vector<32x128xf32> -> vector<32x128xf32>
    %c0_21 = arith.constant 0 : index
    %c0_22 = arith.constant 0 : index
    %29 = vector.load %arg9[%c0_21, %c0_22] : memref<1x128xf32, #tpu.memory_space<vmem>>, vector<1x128xf32>
    %30 = vector.broadcast %29 : vector<1x128xf32> to vector<32x128xf32>
    %31 = arith.addf %28, %30 : vector<32x128xf32>
    %cst_23 = arith.constant 0.000000e+00 : f32
    %32 = vector.broadcast %cst_23 : f32 to vector<32x128xf32>
    %33 = arith.maximumf %31, %32 : vector<32x128xf32>
    %34 = arith.truncf %33 : vector<32x128xf32> to vector<32x128xbf16>
    %c0_24 = arith.constant 0 : index
    %c0_25 = arith.constant 0 : index
    %35 = vector.load %arg10[%c0_24, %c0_25] : memref<128x128xbf16, #tpu.memory_space<vmem>>, vector<128x128xbf16>
    %cst_26 = arith.constant dense<0.000000e+00> : vector<32x128xf32>
    %36 = tpu.matmul %34, %35, %cst_26 {dimension_numbers = #tpu.dot_dimension_numbers<[1], [0], [0], [1], [0, 0, 1, 1], [], []>} : vector<32x128xbf16>, vector<128x128xbf16>, vector<32x128xf32> -> vector<32x128xf32>
    %c0_27 = arith.constant 0 : index
    %c0_28 = arith.constant 0 : index
    %37 = vector.load %arg11[%c0_27, %c0_28] : memref<1x128xf32, #tpu.memory_space<vmem>>, vector<1x128xf32>
    %38 = vector.broadcast %37 : vector<1x128xf32> to vector<32x128xf32>
    %39 = arith.addf %36, %38 : vector<32x128xf32>
    %cst_29 = arith.constant 0.000000e+00 : f32
    %40 = vector.broadcast %cst_29 : f32 to vector<32x128xf32>
    %41 = arith.maximumf %39, %40 : vector<32x128xf32>
    %42 = arith.addf %41, %25 : vector<32x128xf32>
    %43 = arith.truncf %42 : vector<32x128xf32> to vector<32x128xbf16>
    %c0_30 = arith.constant 0 : index
    %c0_31 = arith.constant 0 : index
    %44 = vector.load %arg12[%c0_30, %c0_31] : memref<128x16xbf16, #tpu.memory_space<vmem>>, vector<128x16xbf16>
    %cst_32 = arith.constant dense<0.000000e+00> : vector<32x16xf32>
    %45 = tpu.matmul %43, %44, %cst_32 {dimension_numbers = #tpu.dot_dimension_numbers<[1], [0], [0], [1], [0, 0, 1, 1], [], []>} : vector<32x128xbf16>, vector<128x16xbf16>, vector<32x16xf32> -> vector<32x16xf32>
    %c0_33 = arith.constant 0 : index
    %c0_34 = arith.constant 0 : index
    %46 = vector.load %arg13[%c0_33, %c0_34] : memref<1x16xf32, #tpu.memory_space<vmem>>, vector<1x16xf32>
    %47 = vector.broadcast %46 : vector<1x16xf32> to vector<32x16xf32>
    %48 = arith.addf %45, %47 : vector<32x16xf32>
    %c0_35 = arith.constant 0 : index
    %c0_36 = arith.constant 0 : index
    %49 = vector.load %arg14[%c0_35, %c0_36] : memref<32x16xf32, #tpu.memory_space<vmem>>, vector<32x16xf32>
    tpu.vector_store %arg14[%c0_35, %c0_36], %48 {strides = array<i32>} : memref<32x16xf32, #tpu.memory_space<vmem>>, vector<32x16xf32>,
    return
  }
  func.func @transform_0(%arg0: i32) -> (i32, i32) {
    %c0_i32 = arith.constant 0 : i32
    %c0_i32_0 = arith.constant 0 : i32
    return %arg0, %c0_i32 : i32, i32
  }
  func.func @transform_1(%arg0: i32) -> (i32, i32) {
    %c0_i32 = arith.constant 0 : i32
    %c0_i32_0 = arith.constant 0 : i32
    %c0_i32_1 = arith.constant 0 : i32
    return %c0_i32, %c0_i32_0 : i32, i32
  }
  func.func @transform_2(%arg0: i32) -> (i32, i32) {
    %c0_i32 = arith.constant 0 : i32
    %c0_i32_0 = arith.constant 0 : i32
    %c0_i32_1 = arith.constant 0 : i32
    return %c0_i32, %c0_i32_0 : i32, i32
  }
  func.func @transform_3(%arg0: i32) -> (i32, i32) {
    %c0_i32 = arith.constant 0 : i32
    %c0_i32_0 = arith.constant 0 : i32
    %c0_i32_1 = arith.constant 0 : i32
    return %c0_i32, %c0_i32_0 : i32, i32
  }
  func.func @transform_4(%arg0: i32) -> (i32, i32) {
    %c0_i32 = arith.constant 0 : i32
    %c0_i32_0 = arith.constant 0 : i32
    %c0_i32_1 = arith.constant 0 : i32
    return %c0_i32, %c0_i32_0 : i32, i32
  }
  func.func @transform_5(%arg0: i32) -> (i32, i32) {
    %c0_i32 = arith.constant 0 : i32
    %c0_i32_0 = arith.constant 0 : i32
    %c0_i32_1 = arith.constant 0 : i32
    return %c0_i32, %c0_i32_0 : i32, i32
  }
  func.func @transform_6(%arg0: i32) -> (i32, i32) {
    %c0_i32 = arith.constant 0 : i32
    %c0_i32_0 = arith.constant 0 : i32
    %c0_i32_1 = arith.constant 0 : i32
    return %c0_i32, %c0_i32_0 : i32, i32
  }
  func.func @transform_7(%arg0: i32) -> (i32, i32) {
    %c0_i32 = arith.constant 0 : i32
    %c0_i32_0 = arith.constant 0 : i32
    %c0_i32_1 = arith.constant 0 : i32
    return %c0_i32, %c0_i32_0 : i32, i32
  }
  func.func @transform_8(%arg0: i32) -> (i32, i32) {
    %c0_i32 = arith.constant 0 : i32
    %c0_i32_0 = arith.constant 0 : i32
    %c0_i32_1 = arith.constant 0 : i32
    return %c0_i32, %c0_i32_0 : i32, i32
  }
  func.func @transform_9(%arg0: i32) -> (i32, i32) {
    %c0_i32 = arith.constant 0 : i32
    %c0_i32_0 = arith.constant 0 : i32
    %c0_i32_1 = arith.constant 0 : i32
    return %c0_i32, %c0_i32_0 : i32, i32
  }
  func.func @transform_10(%arg0: i32) -> (i32, i32) {
    %c0_i32 = arith.constant 0 : i32
    %c0_i32_0 = arith.constant 0 : i32
    %c0_i32_1 = arith.constant 0 : i32
    return %c0_i32, %c0_i32_0 : i32, i32
  }
  func.func @transform_11(%arg0: i32) -> (i32, i32) {
    %c0_i32 = arith.constant 0 : i32
    %c0_i32_0 = arith.constant 0 : i32
    %c0_i32_1 = arith.constant 0 : i32
    return %c0_i32, %c0_i32_0 : i32, i32
  }
  func.func @transform_12(%arg0: i32) -> (i32, i32) {
    %c0_i32 = arith.constant 0 : i32
    %c0_i32_0 = arith.constant 0 : i32
    %c0_i32_1 = arith.constant 0 : i32
    return %c0_i32, %c0_i32_0 : i32, i32
  }
  func.func @transform_13(%arg0: i32) -> (i32, i32) {
    %c0_i32 = arith.constant 0 : i32
    %c0_i32_0 = arith.constant 0 : i32
    return %arg0, %c0_i32 : i32, i32
  }
}

</mosaic_0001>

<llo_original>
// kernel: encoder2d_forward.1
$region0: #{encoder2d_forward.1}
  #allocation0 [shape = 'u32[]', space=smem, size = 0x4, offset = 0x4, fixed_abs, tag = 'smem constant byte address 0x4 - core index']
  #allocation1 [shape = 'u32[144,128]{1,0:T(1,128)}', space=vmem, size = 0x12000, scoped, tag = 'internal scratch']
  %s0 = inlined_call_operand.vmem [shape: f32[64,16], index: 0, kind: input, shape index: {}]
  %s1 = inlined_call_operand.vmem [shape: bf16[16,128], index: 1, kind: input, shape index: {}]
  %s2 = inlined_call_operand.vmem [shape: f32[1,128], index: 2, kind: input, shape index: {}]
  %s3 = inlined_call_operand.vmem [shape: bf16[128,128], index: 3, kind: input, shape index: {}]
  %s4 = inlined_call_operand.vmem [shape: f32[1,128], index: 4, kind: input, shape index: {}]
  %s5 = inlined_call_operand.vmem [shape: bf16[128,128], index: 5, kind: input, shape index: {}]
  %s6 = inlined_call_operand.vmem [shape: f32[1,128], index: 6, kind: input, shape index: {}]
  %s7 = inlined_call_operand.vmem [shape: bf16[128,128], index: 7, kind: input, shape index: {}]
  %s8 = inlined_call_operand.vmem [shape: f32[1,128], index: 8, kind: input, shape index: {}]
  %s9 = inlined_call_operand.vmem [shape: bf16[128,128], index: 9, kind: input, shape index: {}]
  %s10 = inlined_call_operand.vmem [shape: f32[1,128], index: 10, kind: input, shape index: {}]
  %s11 = inlined_call_operand.vmem [shape: bf16[128,16], index: 11, kind: input, shape index: {}]
  %s12 = inlined_call_operand.vmem [shape: f32[1,16], index: 12, kind: input, shape index: {}]
  %s13 = inlined_call_operand.vmem [shape: f32[64,16], index: 13, kind: output, shape index: {}]
  %s14 = sld [smem:[#allocation0]]
  $region85: #{encoder2d_forward.1} parent=0
    _
  %s16 = ssub.s32 1, %s14
  %s17 = scalar_select 0, %s16, %s14
  loop: start=0, step=1, limit=4
  $region2: #{encoder2d_forward.1} parent=0 // loop_pre_header
    _
  $region3: #{encoder2d_forward.1} parent=0 // loop_header
    %s19 = sphi 0, %s23
    %p20 = scmp.ge.s32.totalorder %s19, 4
    %s29 = sphi 0, %s31
    %s32 = sphi 0, %s29
    %s33 = sphi 0, %s32
    %s49 = sphi 0, %s33
    %s53 = sphi 0, %s53
    %s55 = sphi 0, %s53
    %s56 = sphi 0, %s55
    %s70 = sphi 0, %s56
    %s74 = sphi 0, %s74
    %s76 = sphi 0, %s74
    %s77 = sphi 0, %s76
    %s91 = sphi 0, %s77
    %s95 = sphi 0, %s95
    %s97 = sphi 0, %s95
    %s98 = sphi 0, %s97
    %s112 = sphi 0, %s98
    %s116 = sphi 0, %s116
    %s118 = sphi 0, %s116
    %s119 = sphi 0, %s118
    %s133 = sphi 0, %s119
    %s137 = sphi 0, %s137
    %s139 = sphi 0, %s137
    %s140 = sphi 0, %s139
    %s154 = sphi 0, %s140
    %s158 = sphi 0, %s158
    %s160 = sphi 0, %s158
    %s161 = sphi 0, %s160
    %s175 = sphi 0, %s161
    %s179 = sphi 0, %s179
    %s181 = sphi 0, %s179
    %s182 = sphi 0, %s181
    %s196 = sphi 0, %s182
    %s200 = sphi 0, %s200
    %s202 = sphi 0, %s200
    %s203 = sphi 0, %s202
    %s217 = sphi 0, %s203
    %s221 = sphi 0, %s221
    %s223 = sphi 0, %s221
    %s224 = sphi 0, %s223
    %s238 = sphi 0, %s224
    %s242 = sphi 0, %s242
    %s244 = sphi 0, %s242
    %s245 = sphi 0, %s244
    %s259 = sphi 0, %s245
    %s263 = sphi 0, %s263
    %s265 = sphi 0, %s263
    %s266 = sphi 0, %s265
    %s280 = sphi 0, %s266
    %s284 = sphi 0, %s284
    %s286 = sphi 0, %s284
    %s287 = sphi 0, %s286
    %s301 = sphi 0, %s287
    %s307 = sphi 0, %s309
    %s310 = sphi 0, %s307
    %s311 = sphi 0, %s310
    %s327 = sphi 0, %s311
  $region4: #{encoder2d_forward.1} parent=0 // loop_header_branch
    %22 = sbr.rel (%p20) target = $region8
  $region5: #{encoder2d_forward.1} parent=0 // loop_body
    %s24 = ssub.s32 %s19, 1
    %s25 = ssub.s32 %s19, 2
    %s26 = sadd.s32 %s19, 1
    %s27 = ssub.s32 %s19, %s26
    %p28 = scmp.eq.s32.totalorder %s27, 0
    %s30 = sadd.s32 %s29, 1
    %s31 = scalar_select %p28, %s29, %s30
    %p34 = pneg %p28
    %p35 = scmp.eq.s32.totalorder %s19, 1
    %p36 = por %p34, %p35
    %p37 = scmp.ne.s32.totalorder %s29, %s32
    %p38 = scmp.eq.s32.totalorder %s19, 0
    %p39 = por %p37, %p38
    %p40 = scmp.ne.s32.totalorder %s29, %s32
    %p41 = scmp.eq.s32.totalorder %s24, 1
    %p42 = por %p40, %p41
    %p43 = scmp.ne.s32.totalorder %s32, %s33
    %p44 = scmp.eq.s32.totalorder %s24, 0
    %p45 = por %p43, %p44
    %p46 = scmp.ne.s32.totalorder %s32, %s33
    %p47 = scmp.eq.s32.totalorder %s25, 1
    %p48 = por %p46, %p47
    %p50 = scmp.ne.s32.totalorder %s33, %s49
    %p51 = scmp.eq.s32.totalorder %s25, 0
    %p52 = por %p50, %p51
    %s54 = sadd.s32 %s53, 1
    %p57 = scmp.eq.s32.totalorder %s19, 1
    %p58 = scmp.ne.s32.totalorder %s53, %s55
    %p59 = scmp.eq.s32.totalorder %s19, 0
    %p60 = por %p58, %p59
    %p61 = scmp.ne.s32.totalorder %s53, %s55
    %p62 = scmp.eq.s32.totalorder %s24, 1
    %p63 = por %p61, %p62
    %p64 = scmp.ne.s32.totalorder %s55, %s56
    %p65 = scmp.eq.s32.totalorder %s24, 0
    %p66 = por %p64, %p65
    %p67 = scmp.ne.s32.totalorder %s55, %s56
    %p68 = scmp.eq.s32.totalorder %s25, 1
    %p69 = por %p67, %p68
    %p71 = scmp.ne.s32.totalorder %s56, %s70
    %p72 = scmp.eq.s32.totalorder %s25, 0
    %p73 = por %p71, %p72
    %s75 = sadd.s32 %s74, 1
    %p78 = scmp.eq.s32.totalorder %s19, 1
    %p79 = scmp.ne.s32.totalorder %s74, %s76
    %p80 = scmp.eq.s32.totalorder %s19, 0
    %p81 = por %p79, %p80
    %p82 = scmp.ne.s32.totalorder %s74, %s76
    %p83 = scmp.eq.s32.totalorder %s24, 1
    %p84 = por %p82, %p83
    %p85 = scmp.ne.s32.totalorder %s76, %s77
    %p86 = scmp.eq.s32.totalorder %s24, 0
    %p87 = por %p85, %p86
    %p88 = scmp.ne.s32.totalorder %s76, %s77
    %p89 = scmp.eq.s32.totalorder %s25, 1
    %p90 = por %p88, %p89
    %p92 = scmp.ne.s32.totalorder %s77, %s91
    %p93 = scmp.eq.s32.totalorder %s25, 0
    %p94 = por %p92, %p93
    %s96 = sadd.s32 %s95, 1
    %p99 = scmp.eq.s32.totalorder %s19, 1
    %p100 = scmp.ne.s32.totalorder %s95, %s97
    %p101 = scmp.eq.s32.totalorder %s19, 0
    %p102 = por %p100, %p101
    %p103 = scmp.ne.s32.totalorder %s95, %s97
    %p104 = scmp.eq.s32.totalorder %s24, 1
    %p105 = por %p103, %p104
    %p106 = scmp.ne.s32.totalorder %s97, %s98
    %p107 = scmp.eq.s32.totalorder %s24, 0
    %p108 = por %p106, %p107
    %p109 = scmp.ne.s32.totalorder %s97, %s98
    %p110 = scmp.eq.s32.totalorder %s25, 1
    %p111 = por %p109, %p110
    %p113 = scmp.ne.s32.totalorder %s98, %s112
    %p114 = scmp.eq.s32.totalorder %s25, 0
    %p115 = por %p113, %p114
    %s117 = sadd.s32 %s116, 1
    %p120 = scmp.eq.s32.totalorder %s19, 1
    %p121 = scmp.ne.s32.totalorder %s116, %s118
    %p122 = scmp.eq.s32.totalorder %s19, 0
    %p123 = por %p121, %p122
    %p124 = scmp.ne.s32.totalorder %s116, %s118
    %p125 = scmp.eq.s32.totalorder %s24, 1
    %p126 = por %p124, %p125
    %p127 = scmp.ne.s32.totalorder %s118, %s119
    %p128 = scmp.eq.s32.totalorder %s24, 0
    %p129 = por %p127, %p128
    %p130 = scmp.ne.s32.totalorder %s118, %s119
    %p131 = scmp.eq.s32.totalorder %s25, 1
    %p132 = por %p130, %p131
    %p134 = scmp.ne.s32.totalorder %s119, %s133
    %p135 = scmp.eq.s32.totalorder %s25, 0
    %p136 = por %p134, %p135
    %s138 = sadd.s32 %s137, 1
    %p141 = scmp.eq.s32.totalorder %s19, 1
    %p142 = scmp.ne.s32.totalorder %s137, %s139
    %p143 = scmp.eq.s32.totalorder %s19, 0
    %p144 = por %p142, %p143
    %p145 = scmp.ne.s32.totalorder %s137, %s139
    %p146 = scmp.eq.s32.totalorder %s24, 1
    %p147 = por %p145, %p146
    %p148 = scmp.ne.s32.totalorder %s139, %s140
    %p149 = scmp.eq.s32.totalorder %s24, 0
    %p150 = por %p148, %p149
    %p151 = scmp.ne.s32.totalorder %s139, %s140
    %p152 = scmp.eq.s32.totalorder %s25, 1
    %p153 = por %p151, %p152
    %p155 = scmp.ne.s32.totalorder %s140, %s154
    %p156 = scmp.eq.s32.totalorder %s25, 0
    %p157 = por %p155, %p156
    %s159 = sadd.s32 %s158, 1
    %p162 = scmp.eq.s32.totalorder %s19, 1
    %p163 = scmp.ne.s32.totalorder %s158, %s160
    %p164 = scmp.eq.s32.totalorder %s19, 0
    %p165 = por %p163, %p164
    %p166 = scmp.ne.s32.totalorder %s158, %s160
    %p167 = scmp.eq.s32.totalorder %s24, 1
    %p168 = por %p166, %p167
    %p169 = scmp.ne.s32.totalorder %s160, %s161
    %p170 = scmp.eq.s32.totalorder %s24, 0
    %p171 = por %p169, %p170
    %p172 = scmp.ne.s32.totalorder %s160, %s161
    %p173 = scmp.eq.s32.totalorder %s25, 1
    %p174 = por %p172, %p173
    %p176 = scmp.ne.s32.totalorder %s161, %s175
    %p177 = scmp.eq.s32.totalorder %s25, 0
    %p178 = por %p176, %p177
    %s180 = sadd.s32 %s179, 1
    %p183 = scmp.eq.s32.totalorder %s19, 1
    %p184 = scmp.ne.s32.totalorder %s179, %s181
    %p185 = scmp.eq.s32.totalorder %s19, 0
    %p186 = por %p184, %p185
    %p187 = scmp.ne.s32.totalorder %s179, %s181
    %p188 = scmp.eq.s32.totalorder %s24, 1
    %p189 = por %p187, %p188
    %p190 = scmp.ne.s32.totalorder %s181, %s182
    %p191 = scmp.eq.s32.totalorder %s24, 0
    %p192 = por %p190, %p191
    %p193 = scmp.ne.s32.totalorder %s181, %s182
    %p194 = scmp.eq.s32.totalorder %s25, 1
    %p195 = por %p193, %p194
    %p197 = scmp.ne.s32.totalorder %s182, %s196
    %p198 = scmp.eq.s32.totalorder %s25, 0
    %p199 = por %p197, %p198
    %s201 = sadd.s32 %s200, 1
    %p204 = scmp.eq.s32.totalorder %s19, 1
    %p205 = scmp.ne.s32.totalorder %s200, %s202
    %p206 = scmp.eq.s32.totalorder %s19, 0
    %p207 = por %p205, %p206
    %p208 = scmp.ne.s32.totalorder %s200, %s202
    %p209 = scmp.eq.s32.totalorder %s24, 1
    %p210 = por %p208, %p209
    %p211 = scmp.ne.s32.totalorder %s202, %s203
    %p212 = scmp.eq.s32.totalorder %s24, 0
    %p213 = por %p211, %p212
    %p214 = scmp.ne.s32.totalorder %s202, %s203
    %p215 = scmp.eq.s32.totalorder %s25, 1
    %p216 = por %p214, %p215
    %p218 = scmp.ne.s32.totalorder %s203, %s217
    %p219 = scmp.eq.s32.totalorder %s25, 0
    %p220 = por %p218, %p219
    %s222 = sadd.s32 %s221, 1
    %p225 = scmp.eq.s32.totalorder %s19, 1
    %p226 = scmp.ne.s32.totalorder %s221, %s223
    %p227 = scmp.eq.s32.totalorder %s19, 0
    %p228 = por %p226, %p227
    %p229 = scmp.ne.s32.totalorder %s221, %s223
    %p230 = scmp.eq.s32.totalorder %s24, 1
    %p231 = por %p229, %p230
    %p232 = scmp.ne.s32.totalorder %s223, %s224
    %p233 = scmp.eq.s32.totalorder %s24, 0
    %p234 = por %p232, %p233
    %p235 = scmp.ne.s32.totalorder %s223, %s224
    %p236 = scmp.eq.s32.totalorder %s25, 1
    %p237 = por %p235, %p236
    %p239 = scmp.ne.s32.totalorder %s224, %s238
    %p240 = scmp.eq.s32.totalorder %s25, 0
    %p241 = por %p239, %p240
    %s243 = sadd.s32 %s242, 1
    %p246 = scmp.eq.s32.totalorder %s19, 1
    %p247 = scmp.ne.s32.totalorder %s242, %s244
    %p248 = scmp.eq.s32.totalorder %s19, 0
    %p249 = por %p247, %p248
    %p250 = scmp.ne.s32.totalorder %s242, %s244
    %p251 = scmp.eq.s32.totalorder %s24, 1
    %p252 = por %p250, %p251
    %p253 = scmp.ne.s32.totalorder %s244, %s245
    %p254 = scmp.eq.s32.totalorder %s24, 0
    %p255 = por %p253, %p254
    %p256 = scmp.ne.s32.totalorder %s244, %s245
    %p257 = scmp.eq.s32.totalorder %s25, 1
    %p258 = por %p256, %p257
    %p260 = scmp.ne.s32.totalorder %s245, %s259
    %p261 = scmp.eq.s32.totalorder %s25, 0
    %p262 = por %p260, %p261
    %s264 = sadd.s32 %s263, 1
    %p267 = scmp.eq.s32.totalorder %s19, 1
    %p268 = scmp.ne.s32.totalorder %s263, %s265
    %p269 = scmp.eq.s32.totalorder %s19, 0
    %p270 = por %p268, %p269
    %p271 = scmp.ne.s32.totalorder %s263, %s265
    %p272 = scmp.eq.s32.totalorder %s24, 1
    %p273 = por %p271, %p272
    %p274 = scmp.ne.s32.totalorder %s265, %s266
    %p275 = scmp.eq.s32.totalorder %s24, 0
    %p276 = por %p274, %p275
    %p277 = scmp.ne.s32.totalorder %s265, %s266
    %p278 = scmp.eq.s32.totalorder %s25, 1
    %p279 = por %p277, %p278
    %p281 = scmp.ne.s32.totalorder %s266, %s280
    %p282 = scmp.eq.s32.totalorder %s25, 0
    %p283 = por %p281, %p282
    %s285 = sadd.s32 %s284, 1
    %p288 = scmp.eq.s32.totalorder %s19, 1
    %p289 = scmp.ne.s32.totalorder %s284, %s286
    %p290 = scmp.eq.s32.totalorder %s19, 0
    %p291 = por %p289, %p290
    %p292 = scmp.ne.s32.totalorder %s284, %s286
    %p293 = scmp.eq.s32.totalorder %s24, 1
    %p294 = por %p292, %p293
    %p295 = scmp.ne.s32.totalorder %s286, %s287
    %p296 = scmp.eq.s32.totalorder %s24, 0
    %p297 = por %p295, %p296
    %p298 = scmp.ne.s32.totalorder %s286, %s287
    %p299 = scmp.eq.s32.totalorder %s25, 1
    %p300 = por %p298, %p299
    %p302 = scmp.ne.s32.totalorder %s287, %s301
    %p303 = scmp.eq.s32.totalorder %s25, 0
    %p304 = por %p302, %p303
    %s305 = ssub.s32 %s19, %s26
    %p306 = scmp.eq.s32.totalorder %s305, 0
    %s308 = sadd.s32 %s307, 1
    %s309 = scalar_select %p306, %s307, %s308
    %p312 = pneg %p306
    %p313 = scmp.eq.s32.totalorder %s19, 1
    %p314 = por %p312, %p313
    %p315 = scmp.ne.s32.totalorder %s307, %s310
    %p316 = scmp.eq.s32.totalorder %s19, 0
    %p317 = por %p315, %p316
    %p318 = scmp.ne.s32.totalorder %s307, %s310
    %p319 = scmp.eq.s32.totalorder %s24, 1
    %p320 = por %p318, %p319
    %p321 = scmp.ne.s32.totalorder %s310, %s311
    %p322 = scmp.eq.s32.totalorder %s24, 0
    %p323 = por %p321, %p322
    %p324 = scmp.ne.s32.totalorder %s310, %s311
    %p325 = scmp.eq.s32.totalorder %s25, 1
    %p326 = por %p324, %p325
    %p328 = scmp.ne.s32.totalorder %s311, %s327
    %p329 = scmp.eq.s32.totalorder %s25, 0
    %p330 = por %p328, %p329
    %p331 = scmp.le.s32.totalorder 1, %s19
    %p332 = scmp.lt.s32.totalorder %s19, 3
    %p333 = pnand %p331, %p332
    %p334 = pneg %p333
    // Predicated region
    $region9: #{encoder2d_forward.1} parent=5 // pred_check
      _
    $region10: #{encoder2d_forward.1} parent=5 // pred_check_branch
      %336 = sbr.rel (%p333) target = $region12
    $region11: #{encoder2d_forward.1} parent=5 // pred_region
      %s337 = ssub.s32 %s19, 1
      // Predicated region
      $region13: #{encoder2d_forward.1} parent=11 // pred_check
        %p338 = pneg %p66
      $region14: #{encoder2d_forward.1} parent=11 // pred_check_branch
        %340 = sbr.rel (%p338) target = $region16
      $region15: #{encoder2d_forward.1} parent=11 // pred_region
        _
      $region16: #{encoder2d_forward.1} parent=11 // pred_fallthru
        _
      // Predicated region
      $region17: #{encoder2d_forward.1} parent=11 // pred_check
        %p341 = pneg %p87
      $region18: #{encoder2d_forward.1} parent=11 // pred_check_branch
        %343 = sbr.rel (%p341) target = $region20
      $region19: #{encoder2d_forward.1} parent=11 // pred_region
        _
      $region20: #{encoder2d_forward.1} parent=11 // pred_fallthru
        _
      // Predicated region
      $region21: #{encoder2d_forward.1} parent=11 // pred_check
        %p344 = pneg %p108
      $region22: #{encoder2d_forward.1} parent=11 // pred_check_branch
        %346 = sbr.rel (%p344) target = $region24
      $region23: #{encoder2d_forward.1} parent=11 // pred_region
        _
      $region24: #{encoder2d_forward.1} parent=11 // pred_fallthru
        _
      // Predicated region
      $region25: #{encoder2d_forward.1} parent=11 // pred_check
        %p347 = pneg %p129
      $region26: #{encoder2d_forward.1} parent=11 // pred_check_branch
        %349 = sbr.rel (%p347) target = $region28
      $region27: #{encoder2d_forward.1} parent=11 // pred_region
        _
      $region28: #{encoder2d_forward.1} parent=11 // pred_fallthru
        _
      // Predicated region
      $region29: #{encoder2d_forward.1} parent=11 // pred_check
        %p350 = pneg %p150
      $region30: #{encoder2d_forward.1} parent=11 // pred_check_branch
        %352 = sbr.rel (%p350) target = $region32
      $region31: #{encoder2d_forward.1} parent=11 // pred_region
        _
      $region32: #{encoder2d_forward.1} parent=11 // pred_fallthru
        _
      // Predicated region
      $region33: #{encoder2d_forward.1} parent=11 // pred_check
        %p353 = pneg %p171
      $region34: #{encoder2d_forward.1} parent=11 // pred_check_branch
        %355 = sbr.rel (%p353) target = $region36
      $region35: #{encoder2d_forward.1} parent=11 // pred_region
        _
      $region36: #{encoder2d_forward.1} parent=11 // pred_fallthru
        _
      // Predicated region
      $region37: #{encoder2d_forward.1} parent=11 // pred_check
        %p356 = pneg %p192
      $region38: #{encoder2d_forward.1} parent=11 // pred_check_branch
        %358 = sbr.rel (%p356) target = $region40
      $region39: #{encoder2d_forward.1} parent=11 // pred_region
        _
      $region40: #{encoder2d_forward.1} parent=11 // pred_fallthru
        _
      // Predicated region
      $region41: #{encoder2d_forward.1} parent=11 // pred_check
        %p359 = pneg %p213
      $region42: #{encoder2d_forward.1} parent=11 // pred_check_branch
        %361 = sbr.rel (%p359) target = $region44
      $region43: #{encoder2d_forward.1} parent=11 // pred_region
        _
      $region44: #{encoder2d_forward.1} parent=11 // pred_fallthru
        _
      // Predicated region
      $region45: #{encoder2d_forward.1} parent=11 // pred_check
        %p362 = pneg %p234
      $region46: #{encoder2d_forward.1} parent=11 // pred_check_branch
        %364 = sbr.rel (%p362) target = $region48
      $region47: #{encoder2d_forward.1} parent=11 // pred_region
        _
      $region48: #{encoder2d_forward.1} parent=11 // pred_fallthru
        _
      // Predicated region
      $region49: #{encoder2d_forward.1} parent=11 // pred_check
        %p365 = pneg %p255
      $region50: #{encoder2d_forward.1} parent=11 // pred_check_branch
        %367 = sbr.rel (%p365) target = $region52
      $region51: #{encoder2d_forward.1} parent=11 // pred_region
        _
      $region52: #{encoder2d_forward.1} parent=11 // pred_fallthru
        _
      // Predicated region
      $region53: #{encoder2d_forward.1} parent=11 // pred_check
        %p368 = pneg %p276
      $region54: #{encoder2d_forward.1} parent=11 // pred_check_branch
        %370 = sbr.rel (%p368) target = $region56
      $region55: #{encoder2d_forward.1} parent=11 // pred_region
        _
      $region56: #{encoder2d_forward.1} parent=11 // pred_fallthru
        _
      // Predicated region
      $region57: #{encoder2d_forward.1} parent=11 // pred_check
        %p371 = pneg %p297
      $region58: #{encoder2d_forward.1} parent=11 // pred_check_branch
        %373 = sbr.rel (%p371) target = $region60
      $region59: #{encoder2d_forward.1} parent=11 // pred_region
        _
      $region60: #{encoder2d_forward.1} parent=11 // pred_fallthru
        _
    $region12: #{encoder2d_forward.1} parent=5 // pred_fallthru
      _
    %p374 = scmp.lt.s32.totalorder %s19, 2
    // Predicated region
    $region61: #{encoder2d_forward.1} parent=5 // pred_check
      %p375 = pneg %p374
    $region62: #{encoder2d_forward.1} parent=5 // pred_check_branch
      %377 = sbr.rel (%p375) target = $region64
    $region63: #{encoder2d_forward.1} parent=5 // pred_region
      // Predicated region
      $region65: #{encoder2d_forward.1} parent=63 // pred_check
        %p378 = pneg %p39
      $region66: #{encoder2d_forward.1} parent=63 // pred_check_branch
        %380 = sbr.rel (%p378) target = $region68
      $region67: #{encoder2d_forward.1} parent=63 // pred_region
        %s381 = smul.u32 4, %s19
        %p382 = scmp.lt.s32.totalorder %s381, 7
        %s383 = scalar_select %p382, %s381, 7
        %s384 = smul.addr %s383, 8
        %s385 = scalar_lea.vmem %s0, %s384
        %s386 = smul.u32 4, %s19
      $region68: #{encoder2d_forward.1} parent=63 // pred_fallthru
        _
    $region64: #{encoder2d_forward.1} parent=5 // pred_fallthru
      _
    %p387 = scmp.le.s32.totalorder 1, %s19
    %p388 = scmp.lt.s32.totalorder %s19, 3
    %p389 = pnand %p387, %p388
    %p390 = pneg %p389
    // Predicated region
    $region69: #{encoder2d_forward.1} parent=5 // pred_check
      _
    $region70: #{encoder2d_forward.1} parent=5 // pred_check_branch
      %392 = sbr.rel (%p389) target = $region72
    $region71: #{encoder2d_forward.1} parent=5 // pred_region
      %s393 = ssub.s32 %s19, 1
      %s394 = smul.u32 4, %s24
      %p395 = scmp.lt.s32.totalorder %s394, 7
      %s396 = scalar_select %p395, %s394, 7
      %s397 = smul.addr %s396, 8
      %s398 = scalar_lea.vmem %s0, %s397
      %p399 = pneg %p45
      %p400 = pneg %p42
      %p401 = pneg %p66
      %p402 = pneg %p63
      %p403 = pneg %p87
      %p404 = pneg %p84
      %p405 = pneg %p108
      %p406 = pneg %p105
      %p407 = pneg %p129
      %p408 = pneg %p126
      %p409 = pneg %p150
      %p410 = pneg %p147
      %p411 = pneg %p171
      %p412 = pneg %p168
      %p413 = pneg %p192
      %p414 = pneg %p189
      %p415 = pneg %p213
      %p416 = pneg %p210
      %p417 = pneg %p234
      %p418 = pneg %p231
      %p419 = pneg %p255
      %p420 = pneg %p252
      %p421 = pneg %p276
      %p422 = pneg %p273
      %p423 = pneg %p297
      %p424 = pneg %p294
      %p425 = pneg %p323
      %p426 = pneg %p320
      %s427 = smul.u32 4, %s24
      %p428 = scmp.lt.s32.totalorder %s427, 7
      %s429 = scalar_select %p428, %s427, 7
      %s430 = smul.addr %s429, 8
      %s431 = scalar_lea.vmem %s13, %s430
      %s432 = smul.u32 4, %s24
      %p433 = scmp.lt.s32.totalorder %s432, 7
      %s434 = scalar_select %p433, %s432, 7
      %s435 = smul.addr %s434, 8
      %s436 = scalar_lea.vmem %s0, %s435
      %s437 = smul.u32 4, %s24
      %s438 = smul.u32 4, %s24
      %p439 = scmp.lt.s32.totalorder %s438, 7
      %s440 = scalar_select %p439, %s438, 7
      %s441 = smul.addr %s440, 8
      %s442 = scalar_lea.vmem %s13, %s441
      %s443 = smul.u32 4, %s24
      %v445 = vld [vmem:[%s436] sm:$0xff]
      %v446 = vld [vmem:[%s436 + $0x8] sm:$0xff]
      %v447 = vld [vmem:[%s436 + $0x10] sm:$0xff]
      %v448 = vld [vmem:[%s436 + $0x18] sm:$0xff]
      %v449 = vpack.c.bf16 %v446, %v445
      %v450 = vpack.c.bf16 %v448, %v447
      %v451 = vld [vmem:[%s1] sm:$0xf]
      %v452 = vld [vmem:[%s1 + $0x4] sm:$0xf]
      %v453 = vld [vmem:[%s2] sm:$0x1]
      %v455 = vlaneseq
      %v456 = vshrl.u32 %v455, 7
      %v457 = vsub.s32 0, %v456
      %v458 = vrot.slane %v453, %v457
      %v462 = vunpack.c.l.b16 %v451
      %v463 = vunpack.c.l.b16 %v452
      %v464 = vpack.c.b16 %v463, %v462
      %vm466 = vcmask 130048
      %v468 = vsel %vm466, %v449, 0
      %v471 = vsel %vm466, %v450, 0
      %473 = vmatprep.subr.bf16.mxu0 0
      %474 = vmatpush1.bf16.msra.mxu0 %v464
      %475 = vmatprep.subr.bf16.mxu0 0
      %476 = vmatpush1.bf16.msra.mxu0 0
      %477 = vmatprep.subr.bf16.mxu0 0
      %478 = vmatpush1.bf16.msra.mxu0 0
      %479 = vmatprep.subr.bf16.mxu0 0
      %480 = vmatpush1.bf16.msra.mxu0 0
      %481 = vmatprep.subr.bf16.mxu0 0
      %482 = vmatpush1.bf16.msra.mxu0 0
      %483 = vmatprep.subr.bf16.mxu0 0
      %484 = vmatpush1.bf16.msra.mxu0 0
      %485 = vmatprep.subr.bf16.mxu0 0
      %486 = vmatpush1.bf16.msra.mxu0 0
      %487 = vmatprep.subr.bf16.mxu0 0
      %488 = vmatpush1.bf16.msra.mxu0 0
      %489 = vmatprep.subr.bf16.mxu0 0
      %490 = vmatpush1.bf16.msra.mxu0 0
      %491 = vmatprep.subr.bf16.mxu0 0
      %492 = vmatpush1.bf16.msra.mxu0 0
      %493 = vmatprep.subr.bf16.mxu0 0
      %494 = vmatpush1.bf16.msra.mxu0 0
      %495 = vmatprep.subr.bf16.mxu0 0
      %496 = vmatpush1.bf16.msra.mxu0 0
      %497 = vmatprep.subr.bf16.mxu0 0
      %498 = vmatpush1.bf16.msra.mxu0 0
      %499 = vmatprep.subr.bf16.mxu0 0
      %500 = vmatpush1.bf16.msra.mxu0 0
      %501 = vmatprep.subr.bf16.mxu0 0
      %502 = vmatpush1.bf16.msra.mxu0 0
      %503 = vmatprep.subr.bf16.mxu0 0
      %504 = vmatpush1.bf16.msra.mxu0 0
      %505 = vmatprep.mubr.bf16.mxu0 0
      %506 = vmatmul.mubr.bf16.gmra.mrb[0].mxu0 %v468
      %v507 = vpop.f32.mrb[0].mxu0
      %v508 = vadd.f32 %v458, %v507
      %v509 = vpop.f32.mrb[0].mxu0
      %v510 = vpop.f32.mrb[0].mxu0
      %v511 = vadd.f32 %v458, %v510
      %v512 = vpop.f32.mrb[0].mxu0
      %513 = vmatprep.mubr.bf16.mxu0 0
      %514 = vmatmul.mubr.bf16.gmra.mrb[0].mxu0 %v471
      %v515 = vpop.f32.mrb[0].mxu0
      %v516 = vadd.f32 %v458, %v515
      %v517 = vpop.f32.mrb[0].mxu0
      %v518 = vpop.f32.mrb[0].mxu0
      %v519 = vadd.f32 %v458, %v518
      %v520 = vpop.f32.mrb[0].mxu0
      %521 = vdwg.mxu0
      %v522 = vmax.f32 %v508, 0.0
      %v523 = vmax.f32 %v511, 0.0
      %v524 = vmax.f32 %v516, 0.0
      %v525 = vmax.f32 %v519, 0.0
      %v526 = vpack.c.bf16 %v523, %v522
      %v527 = vpack.c.bf16 %v525, %v524
      %v528 = vld [vmem:[%s3] sm:$0xf]
      %v529 = vld [vmem:[%s3 + $0x4] sm:$0xf]
      %v530 = vld [vmem:[%s3 + $0x8] sm:$0xf]
      %v531 = vld [vmem:[%s3 + $0xc] sm:$0xf]
      %v532 = vld [vmem:[%s3 + $0x10] sm:$0xf]
      %v533 = vld [vmem:[%s3 + $0x14] sm:$0xf]
      %v534 = vld [vmem:[%s3 + $0x18] sm:$0xf]
      %v535 = vld [vmem:[%s3 + $0x1c] sm:$0xf]
      %v536 = vld [vmem:[%s3 + $0x20] sm:$0xf]
      %v537 = vld [vmem:[%s3 + $0x24] sm:$0xf]
      %v538 = vld [vmem:[%s3 + $0x28] sm:$0xf]
      %v539 = vld [vmem:[%s3 + $0x2c] sm:$0xf]
      %v540 = vld [vmem:[%s3 + $0x30] sm:$0xf]
      %v541 = vld [vmem:[%s3 + $0x34] sm:$0xf]
      %v542 = vld [vmem:[%s3 + $0x38] sm:$0xf]
      %v543 = vld [vmem:[%s3 + $0x3c] sm:$0xf]
      %v544 = vld [vmem:[%s4] sm:$0x1]
      %v546 = vlaneseq
      %v547 = vshrl.u32 %v546, 7
      %v548 = vsub.s32 0, %v547
      %v549 = vrot.slane %v544, %v548
      %v567 = vunpack.c.l.b16 %v528
      %v568 = vunpack.c.l.b16 %v529
      %v569 = vunpack.c.l.b16 %v530
      %v570 = vunpack.c.l.b16 %v531
      %v571 = vunpack.c.l.b16 %v532
      %v572 = vunpack.c.l.b16 %v533
      %v573 = vunpack.c.l.b16 %v534
      %v574 = vunpack.c.l.b16 %v535
      %v575 = vunpack.c.l.b16 %v536
      %v576 = vunpack.c.l.b16 %v537
      %v577 = vunpack.c.l.b16 %v538
      %v578 = vunpack.c.l.b16 %v539
      %v579 = vunpack.c.l.b16 %v540
      %v580 = vunpack.c.l.b16 %v541
      %v581 = vunpack.c.l.b16 %v542
      %v582 = vunpack.c.l.b16 %v543
      %v583 = vpack.c.b16 %v568, %v567
      %v584 = vpack.c.b16 %v570, %v569
      %v585 = vpack.c.b16 %v572, %v571
      %v586 = vpack.c.b16 %v574, %v573
      %v587 = vpack.c.b16 %v576, %v575
      %v588 = vpack.c.b16 %v578, %v577
      %v589 = vpack.c.b16 %v580, %v579
      %v590 = vpack.c.b16 %v582, %v581
      %599 = vmatprep.subr.bf16.mxu0 0
      %600 = vmatpush1.bf16.msra.mxu0 %v583
      %601 = vmatprep.subr.bf16.mxu0 0
      %602 = vmatpush1.bf16.msra.mxu0 %v584
      %603 = vmatprep.subr.bf16.mxu0 0
      %604 = vmatpush1.bf16.msra.mxu0 %v585
      %605 = vmatprep.subr.bf16.mxu0 0
      %606 = vmatpush1.bf16.msra.mxu0 %v586
      %607 = vmatprep.subr.bf16.mxu0 0
      %608 = vmatpush1.bf16.msra.mxu0 %v587
      %609 = vmatprep.subr.bf16.mxu0 0
      %610 = vmatpush1.bf16.msra.mxu0 %v588
      %611 = vmatprep.subr.bf16.mxu0 0
      %612 = vmatpush1.bf16.msra.mxu0 %v589
      %613 = vmatprep.subr.bf16.mxu0 0
      %614 = vmatpush1.bf16.msra.mxu0 %v590
      %615 = vmatprep.subr.bf16.mxu0 0
      %616 = vmatpush1.bf16.msra.mxu0 0
      %617 = vmatprep.subr.bf16.mxu0 0
      %618 = vmatpush1.bf16.msra.mxu0 0
      %619 = vmatprep.subr.bf16.mxu0 0
      %620 = vmatpush1.bf16.msra.mxu0 0
      %621 = vmatprep.subr.bf16.mxu0 0
      %622 = vmatpush1.bf16.msra.mxu0 0
      %623 = vmatprep.subr.bf16.mxu0 0
      %624 = vmatpush1.bf16.msra.mxu0 0
      %625 = vmatprep.subr.bf16.mxu0 0
      %626 = vmatpush1.bf16.msra.mxu0 0
      %627 = vmatprep.subr.bf16.mxu0 0
      %628 = vmatpush1.bf16.msra.mxu0 0
      %629 = vmatprep.subr.bf16.mxu0 0
      %630 = vmatpush1.bf16.msra.mxu0 0
      %631 = vmatprep.mubr.bf16.mxu0 0
      %632 = vmatmul.mubr.bf16.gmra.mrb[0].mxu0 %v526
      %v633 = vpop.f32.mrb[0].mxu0
      %v634 = vadd.f32 %v549, %v633
      %v635 = vpop.f32.mrb[0].mxu0
      %v636 = vpop.f32.mrb[0].mxu0
      %v637 = vadd.f32 %v549, %v636
      %v638 = vpop.f32.mrb[0].mxu0
      %639 = vmatprep.mubr.bf16.mxu0 0
      %640 = vmatmul.mubr.bf16.gmra.mrb[0].mxu0 %v527
      %v641 = vpop.f32.mrb[0].mxu0
      %v642 = vadd.f32 %v549, %v641
      %v643 = vpop.f32.mrb[0].mxu0
      %v644 = vpop.f32.mrb[0].mxu0
      %v645 = vadd.f32 %v549, %v644
      %v646 = vpop.f32.mrb[0].mxu0
      %647 = vdwg.mxu0
      %v648 = vmax.f32 %v634, 0.0
      %v649 = vmax.f32 %v637, 0.0
      %v650 = vmax.f32 %v642, 0.0
      %v651 = vmax.f32 %v645, 0.0
      %v652 = vpack.c.bf16 %v649, %v648
      %v653 = vpack.c.bf16 %v651, %v650
      %v654 = vld [vmem:[%s5] sm:$0xf]
      %v655 = vld [vmem:[%s5 + $0x4] sm:$0xf]
      %v656 = vld [vmem:[%s5 + $0x8] sm:$0xf]
      %v657 = vld [vmem:[%s5 + $0xc] sm:$0xf]
      %v658 = vld [vmem:[%s5 + $0x10] sm:$0xf]
      %v659 = vld [vmem:[%s5 + $0x14] sm:$0xf]
      %v660 = vld [vmem:[%s5 + $0x18] sm:$0xf]
      %v661 = vld [vmem:[%s5 + $0x1c] sm:$0xf]
      %v662 = vld [vmem:[%s5 + $0x20] sm:$0xf]
      %v663 = vld [vmem:[%s5 + $0x24] sm:$0xf]
      %v664 = vld [vmem:[%s5 + $0x28] sm:$0xf]
      %v665 = vld [vmem:[%s5 + $0x2c] sm:$0xf]
      %v666 = vld [vmem:[%s5 + $0x30] sm:$0xf]
      %v667 = vld [vmem:[%s5 + $0x34] sm:$0xf]
      %v668 = vld [vmem:[%s5 + $0x38] sm:$0xf]
      %v669 = vld [vmem:[%s5 + $0x3c] sm:$0xf]
      %v670 = vld [vmem:[%s6] sm:$0x1]
      %v672 = vlaneseq
      %v673 = vshrl.u32 %v672, 7
      %v674 = vsub.s32 0, %v673
      %v675 = vrot.slane %v670, %v674
      %v693 = vunpack.c.l.b16 %v654
      %v694 = vunpack.c.l.b16 %v655
      %v695 = vunpack.c.l.b16 %v656
      %v696 = vunpack.c.l.b16 %v657
      %v697 = vunpack.c.l.b16 %v658
      %v698 = vunpack.c.l.b16 %v659
      %v699 = vunpack.c.l.b16 %v660
      %v700 = vunpack.c.l.b16 %v661
      %v701 = vunpack.c.l.b16 %v662
      %v702 = vunpack.c.l.b16 %v663
      %v703 = vunpack.c.l.b16 %v664
      %v704 = vunpack.c.l.b16 %v665
      %v705 = vunpack.c.l.b16 %v666
      %v706 = vunpack.c.l.b16 %v667
      %v707 = vunpack.c.l.b16 %v668
      %v708 = vunpack.c.l.b16 %v669
      %v709 = vpack.c.b16 %v694, %v693
      %v710 = vpack.c.b16 %v696, %v695
      %v711 = vpack.c.b16 %v698, %v697
      %v712 = vpack.c.b16 %v700, %v699
      %v713 = vpack.c.b16 %v702, %v701
      %v714 = vpack.c.b16 %v704, %v703
      %v715 = vpack.c.b16 %v706, %v705
      %v716 = vpack.c.b16 %v708, %v707
      %725 = vmatprep.subr.bf16.mxu0 0
      %726 = vmatpush1.bf16.msra.mxu0 %v709
      %727 = vmatprep.subr.bf16.mxu0 0
      %728 = vmatpush1.bf16.msra.mxu0 %v710
      %729 = vmatprep.subr.bf16.mxu0 0
      %730 = vmatpush1.bf16.msra.mxu0 %v711
      %731 = vmatprep.subr.bf16.mxu0 0
      %732 = vmatpush1.bf16.msra.mxu0 %v712
      %733 = vmatprep.subr.bf16.mxu0 0
      %734 = vmatpush1.bf16.msra.mxu0 %v713
      %735 = vmatprep.subr.bf16.mxu0 0
      %736 = vmatpush1.bf16.msra.mxu0 %v714
      %737 = vmatprep.subr.bf16.mxu0 0
      %738 = vmatpush1.bf16.msra.mxu0 %v715
      %739 = vmatprep.subr.bf16.mxu0 0
      %740 = vmatpush1.bf16.msra.mxu0 %v716
      %741 = vmatprep.subr.bf16.mxu0 0
      %742 = vmatpush1.bf16.msra.mxu0 0
      %743 = vmatprep.subr.bf16.mxu0 0
      %744 = vmatpush1.bf16.msra.mxu0 0
      %745 = vmatprep.subr.bf16.mxu0 0
      %746 = vmatpush1.bf16.msra.mxu0 0
      %747 = vmatprep.subr.bf16.mxu0 0
      %748 = vmatpush1.bf16.msra.mxu0 0
      %749 = vmatprep.subr.bf16.mxu0 0
      %750 = vmatpush1.bf16.msra.mxu0 0
      %751 = vmatprep.subr.bf16.mxu0 0
      %752 = vmatpush1.bf16.msra.mxu0 0
      %753 = vmatprep.subr.bf16.mxu0 0
      %754 = vmatpush1.bf16.msra.mxu0 0
      %755 = vmatprep.subr.bf16.mxu0 0
      %756 = vmatpush1.bf16.msra.mxu0 0
      %757 = vmatprep.mubr.bf16.mxu0 0
      %758 = vmatmul.mubr.bf16.gmra.mrb[0].mxu0 %v652
      %v759 = vpop.f32.mrb[0].mxu0
      %v760 = vadd.f32 %v675, %v759
      %v761 = vpop.f32.mrb[0].mxu0
      %v762 = vpop.f32.mrb[0].mxu0
      %v763 = vadd.f32 %v675, %v762
      %v764 = vpop.f32.mrb[0].mxu0
      %765 = vmatprep.mubr.bf16.mxu0 0
      %766 = vmatmul.mubr.bf16.gmra.mrb[0].mxu0 %v653
      %v767 = vpop.f32.mrb[0].mxu0
      %v768 = vadd.f32 %v675, %v767
      %v769 = vpop.f32.mrb[0].mxu0
      %v770 = vpop.f32.mrb[0].mxu0
      %v771 = vadd.f32 %v675, %v770
      %v772 = vpop.f32.mrb[0].mxu0
      %773 = vdwg.mxu0
      %v774 = vmax.f32 %v760, 0.0
      %v775 = vmax.f32 %v763, 0.0
      %v776 = vmax.f32 %v768, 0.0
      %v777 = vmax.f32 %v771, 0.0
      %v778 = vadd.f32 %v774, %v522
      %v779 = vadd.f32 %v775, %v523
      %v780 = vadd.f32 %v776, %v524
      %v781 = vadd.f32 %v777, %v525
      %v782 = vpack.c.bf16 %v779, %v778
      %v783 = vpack.c.bf16 %v781, %v780
      %v784 = vld [vmem:[%s7] sm:$0xf]
      %v785 = vld [vmem:[%s7 + $0x4] sm:$0xf]
      %v786 = vld [vmem:[%s7 + $0x8] sm:$0xf]
      %v787 = vld [vmem:[%s7 + $0xc] sm:$0xf]
      %v788 = vld [vmem:[%s7 + $0x10] sm:$0xf]
      %v789 = vld [vmem:[%s7 + $0x14] sm:$0xf]
      %v790 = vld [vmem:[%s7 + $0x18] sm:$0xf]
      %v791 = vld [vmem:[%s7 + $0x1c] sm:$0xf]
      %v792 = vld [vmem:[%s7 + $0x20] sm:$0xf]
      %v793 = vld [vmem:[%s7 + $0x24] sm:$0xf]
      %v794 = vld [vmem:[%s7 + $0x28] sm:$0xf]
      %v795 = vld [vmem:[%s7 + $0x2c] sm:$0xf]
      %v796 = vld [vmem:[%s7 + $0x30] sm:$0xf]
      %v797 = vld [vmem:[%s7 + $0x34] sm:$0xf]
      %v798 = vld [vmem:[%s7 + $0x38] sm:$0xf]
      %v799 = vld [vmem:[%s7 + $0x3c] sm:$0xf]
      %v800 = vld [vmem:[%s8] sm:$0x1]
      %v802 = vlaneseq
      %v803 = vshrl.u32 %v802, 7
      %v804 = vsub.s32 0, %v803
      %v805 = vrot.slane %v800, %v804
      %v823 = vunpack.c.l.b16 %v784
      %v824 = vunpack.c.l.b16 %v785
      %v825 = vunpack.c.l.b16 %v786
      %v826 = vunpack.c.l.b16 %v787
      %v827 = vunpack.c.l.b16 %v788
      %v828 = vunpack.c.l.b16 %v789
      %v829 = vunpack.c.l.b16 %v790
      %v830 = vunpack.c.l.b16 %v791
      %v831 = vunpack.c.l.b16 %v792
      %v832 = vunpack.c.l.b16 %v793
      %v833 = vunpack.c.l.b16 %v794
      %v834 = vunpack.c.l.b16 %v795
      %v835 = vunpack.c.l.b16 %v796
      %v836 = vunpack.c.l.b16 %v797
      %v837 = vunpack.c.l.b16 %v798
      %v838 = vunpack.c.l.b16 %v799
      %v839 = vpack.c.b16 %v824, %v823
      %v840 = vpack.c.b16 %v826, %v825
      %v841 = vpack.c.b16 %v828, %v827
      %v842 = vpack.c.b16 %v830, %v829
      %v843 = vpack.c.b16 %v832, %v831
      %v844 = vpack.c.b16 %v834, %v833
      %v845 = vpack.c.b16 %v836, %v835
      %v846 = vpack.c.b16 %v838, %v837
      %855 = vmatprep.subr.bf16.mxu0 0
      %856 = vmatpush1.bf16.msra.mxu0 %v839
      %857 = vmatprep.subr.bf16.mxu0 0
      %858 = vmatpush1.bf16.msra.mxu0 %v840
      %859 = vmatprep.subr.bf16.mxu0 0
      %860 = vmatpush1.bf16.msra.mxu0 %v841
      %861 = vmatprep.subr.bf16.mxu0 0
      %862 = vmatpush1.bf16.msra.mxu0 %v842
      %863 = vmatprep.subr.bf16.mxu0 0
      %864 = vmatpush1.bf16.msra.mxu0 %v843
      %865 = vmatprep.subr.bf16.mxu0 0
      %866 = vmatpush1.bf16.msra.mxu0 %v844
      %867 = vmatprep.subr.bf16.mxu0 0
      %868 = vmatpush1.bf16.msra.mxu0 %v845
      %869 = vmatprep.subr.bf16.mxu0 0
      %870 = vmatpush1.bf16.msra.mxu0 %v846
      %871 = vmatprep.subr.bf16.mxu0 0
      %872 = vmatpush1.bf16.msra.mxu0 0
      %873 = vmatprep.subr.bf16.mxu0 0
      %874 = vmatpush1.bf16.msra.mxu0 0
      %875 = vmatprep.subr.bf16.mxu0 0
      %876 = vmatpush1.bf16.msra.mxu0 0
      %877 = vmatprep.subr.bf16.mxu0 0
      %878 = vmatpush1.bf16.msra.mxu0 0
      %879 = vmatprep.subr.bf16.mxu0 0
      %880 = vmatpush1.bf16.msra.mxu0 0
      %881 = vmatprep.subr.bf16.mxu0 0
      %882 = vmatpush1.bf16.msra.mxu0 0
      %883 = vmatprep.subr.bf16.mxu0 0
      %884 = vmatpush1.bf16.msra.mxu0 0
      %885 = vmatprep.subr.bf16.mxu0 0
      %886 = vmatpush1.bf16.msra.mxu0 0
      %887 = vmatprep.mubr.bf16.mxu0 0
      %888 = vmatmul.mubr.bf16.gmra.mrb[0].mxu0 %v782
      %v889 = vpop.f32.mrb[0].mxu0
      %v890 = vadd.f32 %v805, %v889
      %v891 = vpop.f32.mrb[0].mxu0
      %v892 = vpop.f32.mrb[0].mxu0
      %v893 = vadd.f32 %v805, %v892
      %v894 = vpop.f32.mrb[0].mxu0
      %895 = vmatprep.mubr.bf16.mxu0 0
      %896 = vmatmul.mubr.bf16.gmra.mrb[0].mxu0 %v783
      %v897 = vpop.f32.mrb[0].mxu0
      %v898 = vadd.f32 %v805, %v897
      %v899 = vpop.f32.mrb[0].mxu0
      %v900 = vpop.f32.mrb[0].mxu0
      %v901 = vadd.f32 %v805, %v900
      %v902 = vpop.f32.mrb[0].mxu0
      %903 = vdwg.mxu0
      %v904 = vmax.f32 %v890, 0.0
      %v905 = vmax.f32 %v893, 0.0
      %v906 = vmax.f32 %v898, 0.0
      %v907 = vmax.f32 %v901, 0.0
      %v908 = vpack.c.bf16 %v905, %v904
      %v909 = vpack.c.bf16 %v907, %v906
      %v910 = vld [vmem:[%s9] sm:$0xf]
      %v911 = vld [vmem:[%s9 + $0x4] sm:$0xf]
      %v912 = vld [vmem:[%s9 + $0x8] sm:$0xf]
      %v913 = vld [vmem:[%s9 + $0xc] sm:$0xf]
      %v914 = vld [vmem:[%s9 + $0x10] sm:$0xf]
      %v915 = vld [vmem:[%s9 + $0x14] sm:$0xf]
      %v916 = vld [vmem:[%s9 + $0x18] sm:$0xf]
      %v917 = vld [vmem:[%s9 + $0x1c] sm:$0xf]
      %v918 = vld [vmem:[%s9 + $0x20] sm:$0xf]
      %v919 = vld [vmem:[%s9 + $0x24] sm:$0xf]
      %v920 = vld [vmem:[%s9 + $0x28] sm:$0xf]
      %v921 = vld [vmem:[%s9 + $0x2c] sm:$0xf]
      %v922 = vld [vmem:[%s9 + $0x30] sm:$0xf]
      %v923 = vld [vmem:[%s9 + $0x34] sm:$0xf]
      %v924 = vld [vmem:[%s9 + $0x38] sm:$0xf]
      %v925 = vld [vmem:[%s9 + $0x3c] sm:$0xf]
      %v926 = vld [vmem:[%s10] sm:$0x1]
      %v928 = vlaneseq
      %v929 = vshrl.u32 %v928, 7
      %v930 = vsub.s32 0, %v929
      %v931 = vrot.slane %v926, %v930
      %v949 = vunpack.c.l.b16 %v910
      %v950 = vunpack.c.l.b16 %v911
      %v951 = vunpack.c.l.b16 %v912
      %v952 = vunpack.c.l.b16 %v913
      %v953 = vunpack.c.l.b16 %v914
      %v954 = vunpack.c.l.b16 %v915
      %v955 = vunpack.c.l.b16 %v916
      %v956 = vunpack.c.l.b16 %v917
      %v957 = vunpack.c.l.b16 %v918
      %v958 = vunpack.c.l.b16 %v919
      %v959 = vunpack.c.l.b16 %v920
      %v960 = vunpack.c.l.b16 %v921
      %v961 = vunpack.c.l.b16 %v922
      %v962 = vunpack.c.l.b16 %v923
      %v963 = vunpack.c.l.b16 %v924
      %v964 = vunpack.c.l.b16 %v925
      %v965 = vpack.c.b16 %v950, %v949
      %v966 = vpack.c.b16 %v952, %v951
      %v967 = vpack.c.b16 %v954, %v953
      %v968 = vpack.c.b16 %v956, %v955
      %v969 = vpack.c.b16 %v958, %v957
      %v970 = vpack.c.b16 %v960, %v959
      %v971 = vpack.c.b16 %v962, %v961
      %v972 = vpack.c.b16 %v964, %v963
      %981 = vmatprep.subr.bf16.mxu0 0
      %982 = vmatpush1.bf16.msra.mxu0 %v965
      %983 = vmatprep.subr.bf16.mxu0 0
      %984 = vmatpush1.bf16.msra.mxu0 %v966
      %985 = vmatprep.subr.bf16.mxu0 0
      %986 = vmatpush1.bf16.msra.mxu0 %v967
      %987 = vmatprep.subr.bf16.mxu0 0
      %988 = vmatpush1.bf16.msra.mxu0 %v968
      %989 = vmatprep.subr.bf16.mxu0 0
      %990 = vmatpush1.bf16.msra.mxu0 %v969
      %991 = vmatprep.subr.bf16.mxu0 0
      %992 = vmatpush1.bf16.msra.mxu0 %v970
      %993 = vmatprep.subr.bf16.mxu0 0
      %994 = vmatpush1.bf16.msra.mxu0 %v971
      %995 = vmatprep.subr.bf16.mxu0 0
      %996 = vmatpush1.bf16.msra.mxu0 %v972
      %997 = vmatprep.subr.bf16.mxu0 0
      %998 = vmatpush1.bf16.msra.mxu0 0
      %999 = vmatprep.subr.bf16.mxu0 0
      %1000 = vmatpush1.bf16.msra.mxu0 0
      %1001 = vmatprep.subr.bf16.mxu0 0
      %1002 = vmatpush1.bf16.msra.mxu0 0
      %1003 = vmatprep.subr.bf16.mxu0 0
      %1004 = vmatpush1.bf16.msra.mxu0 0
      %1005 = vmatprep.subr.bf16.mxu0 0
      %1006 = vmatpush1.bf16.msra.mxu0 0
      %1007 = vmatprep.subr.bf16.mxu0 0
      %1008 = vmatpush1.bf16.msra.mxu0 0
      %1009 = vmatprep.subr.bf16.mxu0 0
      %1010 = vmatpush1.bf16.msra.mxu0 0
      %1011 = vmatprep.subr.bf16.mxu0 0
      %1012 = vmatpush1.bf16.msra.mxu0 0
      %1013 = vmatprep.mubr.bf16.mxu0 0
      %1014 = vmatmul.mubr.bf16.gmra.mrb[0].mxu0 %v908
      %v1015 = vpop.f32.mrb[0].mxu0
      %v1016 = vadd.f32 %v931, %v1015
      %v1017 = vpop.f32.mrb[0].mxu0
      %v1018 = vpop.f32.mrb[0].mxu0
      %v1019 = vadd.f32 %v931, %v1018
      %v1020 = vpop.f32.mrb[0].mxu0
      %1021 = vmatprep.mubr.bf16.mxu0 0
      %1022 = vmatmul.mubr.bf16.gmra.mrb[0].mxu0 %v909
      %v1023 = vpop.f32.mrb[0].mxu0
      %v1024 = vadd.f32 %v931, %v1023
      %v1025 = vpop.f32.mrb[0].mxu0
      %v1026 = vpop.f32.mrb[0].mxu0
      %v1027 = vadd.f32 %v931, %v1026
      %v1028 = vpop.f32.mrb[0].mxu0
      %1029 = vdwg.mxu0
      %v1030 = vmax.f32 %v1016, 0.0
      %v1031 = vmax.f32 %v1019, 0.0
      %v1032 = vmax.f32 %v1024, 0.0
      %v1033 = vmax.f32 %v1027, 0.0
      %v1034 = vadd.f32 %v1030, %v778
      %v1035 = vadd.f32 %v1031, %v779
      %v1036 = vadd.f32 %v1032, %v780
      %v1037 = vadd.f32 %v1033, %v781
      %v1038 = vpack.c.bf16 %v1035, %v1034
      %v1039 = vpack.c.bf16 %v1037, %v1036
      %v1040 = vld [vmem:[%s11] sm:$0xf]
      %v1041 = vld [vmem:[%s11 + $0x4] sm:$0xf]
      %v1042 = vld [vmem:[%s11 + $0x8] sm:$0xf]
      %v1043 = vld [vmem:[%s11 + $0xc] sm:$0xf]
      %v1044 = vld [vmem:[%s11 + $0x10] sm:$0xf]
      %v1045 = vld [vmem:[%s11 + $0x14] sm:$0xf]
      %v1046 = vld [vmem:[%s11 + $0x18] sm:$0xf]
      %v1047 = vld [vmem:[%s11 + $0x1c] sm:$0xf]
      %v1048 = vld [vmem:[%s11 + $0x20] sm:$0xf]
      %v1049 = vld [vmem:[%s11 + $0x24] sm:$0xf]
      %v1050 = vld [vmem:[%s11 + $0x28] sm:$0xf]
      %v1051 = vld [vmem:[%s11 + $0x2c] sm:$0xf]
      %v1052 = vld [vmem:[%s11 + $0x30] sm:$0xf]
      %v1053 = vld [vmem:[%s11 + $0x34] sm:$0xf]
      %v1054 = vld [vmem:[%s11 + $0x38] sm:$0xf]
      %v1055 = vld [vmem:[%s11 + $0x3c] sm:$0xf]
      %v1056 = vld [vmem:[%s12] sm:$0x1]
      %v1058 = vlaneseq
      %v1059 = vshrl.u32 %v1058, 7
      %v1060 = vsub.s32 0, %v1059
      %v1061 = vrot.slane %v1056, %v1060
      %v1079 = vunpack.c.l.b16 %v1040
      %v1080 = vunpack.c.l.b16 %v1041
      %v1081 = vunpack.c.l.b16 %v1042
      %v1082 = vunpack.c.l.b16 %v1043
      %v1083 = vunpack.c.l.b16 %v1044
      %v1084 = vunpack.c.l.b16 %v1045
      %v1085 = vunpack.c.l.b16 %v1046
      %v1086 = vunpack.c.l.b16 %v1047
      %v1087 = vunpack.c.l.b16 %v1048
      %v1088 = vunpack.c.l.b16 %v1049
      %v1089 = vunpack.c.l.b16 %v1050
      %v1090 = vunpack.c.l.b16 %v1051
      %v1091 = vunpack.c.l.b16 %v1052
      %v1092 = vunpack.c.l.b16 %v1053
      %v1093 = vunpack.c.l.b16 %v1054
      %v1094 = vunpack.c.l.b16 %v1055
      %v1095 = vpack.c.b16 %v1080, %v1079
      %v1096 = vpack.c.b16 %v1082, %v1081
      %v1097 = vpack.c.b16 %v1084, %v1083
      %v1098 = vpack.c.b16 %v1086, %v1085
      %v1099 = vpack.c.b16 %v1088, %v1087
      %v1100 = vpack.c.b16 %v1090, %v1089
      %v1101 = vpack.c.b16 %v1092, %v1091
      %v1102 = vpack.c.b16 %v1094, %v1093
      %1111 = vmatprep.subr.bf16.mxu0 0
      %1112 = vmatpush1.bf16.msra.mxu0 %v1095
      %1113 = vmatprep.subr.bf16.mxu0 0
      %1114 = vmatpush1.bf16.msra.mxu0 %v1096
      %1115 = vmatprep.subr.bf16.mxu0 0
      %1116 = vmatpush1.bf16.msra.mxu0 %v1097
      %1117 = vmatprep.subr.bf16.mxu0 0
      %1118 = vmatpush1.bf16.msra.mxu0 %v1098
      %1119 = vmatprep.subr.bf16.mxu0 0
      %1120 = vmatpush1.bf16.msra.mxu0 %v1099
      %1121 = vmatprep.subr.bf16.mxu0 0
      %1122 = vmatpush1.bf16.msra.mxu0 %v1100
      %1123 = vmatprep.subr.bf16.mxu0 0
      %1124 = vmatpush1.bf16.msra.mxu0 %v1101
      %1125 = vmatprep.subr.bf16.mxu0 0
      %1126 = vmatpush1.bf16.msra.mxu0 %v1102
      %1127 = vmatprep.subr.bf16.mxu0 0
      %1128 = vmatpush1.bf16.msra.mxu0 0
      %1129 = vmatprep.subr.bf16.mxu0 0
      %1130 = vmatpush1.bf16.msra.mxu0 0
      %1131 = vmatprep.subr.bf16.mxu0 0
      %1132 = vmatpush1.bf16.msra.mxu0 0
      %1133 = vmatprep.subr.bf16.mxu0 0
      %1134 = vmatpush1.bf16.msra.mxu0 0
      %1135 = vmatprep.subr.bf16.mxu0 0
      %1136 = vmatpush1.bf16.msra.mxu0 0
      %1137 = vmatprep.subr.bf16.mxu0 0
      %1138 = vmatpush1.bf16.msra.mxu0 0
      %1139 = vmatprep.subr.bf16.mxu0 0
      %1140 = vmatpush1.bf16.msra.mxu0 0
      %1141 = vmatprep.subr.bf16.mxu0 0
      %1142 = vmatpush1.bf16.msra.mxu0 0
      %1143 = vmatprep.mubr.bf16.mxu0 0
      %1144 = vmatmul.mubr.bf16.gmra.mrb[0].mxu0 %v1038
      %v1145 = vpop.f32.mrb[0].mxu0
      %v1146 = vadd.f32 %v1061, %v1145
      %v1147 = vpop.f32.mrb[0].mxu0
      %v1148 = vpop.f32.mrb[0].mxu0
      %v1149 = vadd.f32 %v1061, %v1148
      %v1150 = vpop.f32.mrb[0].mxu0
      %1151 = vmatprep.mubr.bf16.mxu0 0
      %1152 = vmatmul.mubr.bf16.gmra.mrb[0].mxu0 %v1039
      %v1153 = vpop.f32.mrb[0].mxu0
      %v1154 = vadd.f32 %v1061, %v1153
      %v1155 = vpop.f32.mrb[0].mxu0
      %v1156 = vpop.f32.mrb[0].mxu0
      %v1157 = vadd.f32 %v1061, %v1156
      %v1158 = vpop.f32.mrb[0].mxu0
      %1159 = vdwg.mxu0
      %1160 = vst.msk [vmem:[%s442] sm:$0xff] %vm466, %v1146
      %1161 = vst.msk [vmem:[%s442 + $0x8] sm:$0xff] %vm466, %v1149
      %1162 = vst.msk [vmem:[%s442 + $0x10] sm:$0xff] %vm466, %v1154
      %1163 = vst.msk [vmem:[%s442 + $0x18] sm:$0xff] %vm466, %v1157
      %s1164 = smul.u32 4, %s24
      %p1165 = scmp.lt.s32.totalorder %s1164, 7
      %s1166 = scalar_select %p1165, %s1164, 7
      %s1167 = smul.addr %s1166, 8
      %s1168 = scalar_lea.vmem %s13, %s1167
      // Predicated region
      $region73: #{encoder2d_forward.1} parent=71 // pred_check
        %p1169 = pneg %p320
      $region74: #{encoder2d_forward.1} parent=71 // pred_check_branch
        %1171 = sbr.rel (%p1169) target = $region76
      $region75: #{encoder2d_forward.1} parent=71 // pred_region
        %s1172 = smul.u32 4, %s24
      $region76: #{encoder2d_forward.1} parent=71 // pred_fallthru
        _
    $region72: #{encoder2d_forward.1} parent=5 // pred_fallthru
      _
    %p1173 = scmp.le.s32.totalorder 2, %s19
    // Predicated region
    $region77: #{encoder2d_forward.1} parent=5 // pred_check
      %p1174 = pneg %p1173
    $region78: #{encoder2d_forward.1} parent=5 // pred_check_branch
      %1176 = sbr.rel (%p1174) target = $region80
    $region79: #{encoder2d_forward.1} parent=5 // pred_region
      %s1177 = ssub.s32 %s19, 2
      // Predicated region
      $region81: #{encoder2d_forward.1} parent=79 // pred_check
        %p1178 = pneg %p326
      $region82: #{encoder2d_forward.1} parent=79 // pred_check_branch
        %1180 = sbr.rel (%p1178) target = $region84
      $region83: #{encoder2d_forward.1} parent=79 // pred_region
        %s1181 = smul.u32 4, %s25
        %p1182 = scmp.lt.s32.totalorder %s1181, 7
        %s1183 = scalar_select %p1182, %s1181, 7
        %s1184 = smul.addr %s1183, 8
        %s1185 = scalar_lea.vmem %s13, %s1184
      $region84: #{encoder2d_forward.1} parent=79 // pred_fallthru
        _
    $region80: #{encoder2d_forward.1} parent=5 // pred_fallthru
      _
  $region6: #{encoder2d_forward.1} parent=0 // loop_footer
    %s23 = sadd.s32 1, %s19
  $region7: #{encoder2d_forward.1} parent=0 // loop_footer_branch
    %18 = sbr.rel target = $region3
  $region8: #{encoder2d_forward.1} parent=0 // loop_exit
    _

</llo_original>
